<compile_context>
chip_gen: v6e
topology: v6e:2x2x1
jax: 0.10.0
libtpu: 0.0.40
codegen_flags: <defaults>
</compile_context>

<pallas_src>
import functools

import jax
import jax.numpy as jnp
from jax.experimental import pallas as pl
from jax.experimental.pallas import tpu as pltpu

_LANE = 128


def _round_up(x, n):
    return (x + n - 1) // n * n


def _detect_num_cores():
    """Best-effort TensorCore count per device (v7x megacore => 2). Falls back to 1."""
    try:
        info = pltpu.get_tpu_info()
        for attr in ("num_cores", "core_count", "num_tensorcores"):
            v = getattr(info, attr, None)
            if v is not None:
                v = int(v)
                if v > 0:
                    return v
    except Exception:
        pass
    try:
        d = jax.devices()[0]
        for attr in ("num_cores", "core_count"):
            v = getattr(d, attr, None)
            if v is not None:
                v = int(v)
                if v > 0:
                    return v
    except Exception:
        pass
    return 1


def _mlp_kernel(x_ref, w1_ref, b1_ref, w2_ref, b2_ref, w3_ref, b3_ref,
                w4_ref, b4_ref, o_ref):
    """Fused 4-layer MLP on one row-tile of the flattened input.

    Matmuls run on the MXU with f32 accumulation (operands may be bf16);
    bias-add / relu / sigmoid stay in f32 on the VPU/EUP.  The bf16 cast of
    the input happens here (per tile), not in the wrapper.  Dropout layers
    are identity in eval mode, so they are omitted.
    """
    mat_dtype = w1_ref.dtype
    out_dim = o_ref.shape[1]

    x = x_ref[...].astype(mat_dtype)

    h = jnp.dot(x, w1_ref[...],
                preferred_element_type=jnp.float32) + b1_ref[...]
    h = jnp.maximum(h, 0.0)

    h = jnp.dot(h.astype(mat_dtype), w2_ref[...],
                preferred_element_type=jnp.float32) + b2_ref[...]
    h = jnp.maximum(h, 0.0)

    h = jnp.dot(h.astype(mat_dtype), w3_ref[...],
                preferred_element_type=jnp.float32) + b3_ref[...]
    h = jnp.maximum(h, 0.0)

    # fc4 weights are lane-padded (zeros) for a clean full-lane MXU op; slice
    # back to the real columns *before* bias / sigmoid / store so the EUP work
    # and the HBM write cover only out_dim columns.
    logits_full = jnp.dot(h.astype(mat_dtype), w4_ref[...],
                          preferred_element_type=jnp.float32)
    logits = logits_full[:, :out_dim] + b4_ref[...]
    o_ref[...] = jax.nn.sigmoid(logits).astype(o_ref.dtype)


@functools.partial(
    jax.jit,
    static_argnames=("row_tile", "use_bf16", "num_cores", "out_dtype"))
def neural_network_forward(x, params, *, row_tile=4096, use_bf16=True,
                           num_cores=None, out_dtype=jnp.float32):
    """x: [batch, seq, input_dim] float32 -> [batch, seq, 2] `out_dtype`."""
    b, s, d = x.shape
    m = b * s
    x2 = x.reshape(m, d)                      # metadata-only; no HBM pass

    w1, b1, w2, b2, w3, b3, w4, b4 = params
    u1, u2, u3 = w1.shape[1], w2.shape[1], w3.shape[1]
    out_dim = w4.shape[1]

    # --- MXU operand dtype: bf16 on all generations (v5e/v6e/v7x MXUs are
    # bf16-native); accumulation and elementwise math stay f32 in-kernel.
    mat_dtype = jnp.bfloat16 if use_bf16 else jnp.float32
    w1c, w2c, w3c, w4c = (w.astype(mat_dtype) for w in (w1, w2, w3, w4))
    # biases stay f32.

    # fc4: lane-pad weight columns (tiny, a few KiB) so the last matmul is a
    # full-lane MXU op; kernel slices the result back to out_dim.
    n4 = _round_up(out_dim, _LANE)
    if n4 != out_dim:
        w4c = jnp.pad(w4c, ((0, 0), (0, n4 - out_dim)))

    # --- Row tile selection -------------------------------------------------
    # Large tile (amortizes ~0.35us/step and fills the MXU M dim); sublane
    # multiple (16 for bf16, 8 for f32).  The ">= num_cores grid steps" cap is
    # applied only when more than one TensorCore is available (v7x megacore);
    # single-TC v5e/v6e run the grid as a serial loop, so no split there.
    # Ragged last tiles are handled by Pallas partial-block semantics (no
    # wrapper-side row padding pass over x).
    if num_cores is None:
        num_cores = _detect_num_cores()
    num_cores = max(1, int(num_cores))

    sub = 16 if use_bf16 else 8
    rt = min(int(row_tile), _round_up(m, sub))
    if num_cores > 1:
        rt = min(rt, max(sub, _round_up(pl.cdiv(m, num_cores), sub)))
    rt = max(sub, _round_up(rt, sub))
    grid_m = pl.cdiv(m, rt)

    # Weights / biases: full-array blocks, resident in VMEM every step
    # (~35 KiB total, so default double-buffering is harmless).
    full = lambda shape: pl.BlockSpec(shape, lambda i: (0, 0))

    out2 = pl.pallas_call(
        _mlp_kernel,
        out_shape=jax.ShapeDtypeStruct((m, out_dim), out_dtype),
        grid_spec=pltpu.PrefetchScalarGridSpec(
            num_scalar_prefetch=0,
            grid=(grid_m,),
            in_specs=[
                pl.BlockSpec((rt, d), lambda i: (i, 0)),     # x row-tile (f32)
                full((d, u1)),  full((1, u1)),               # fc1
                full((u1, u2)), full((1, u2)),               # fc2
                full((u2, u3)), full((1, u3)),               # fc3
                full((u3, n4)), full((1, out_dim)),          # fc4 (lane-padded W)
            ],
            out_specs=pl.BlockSpec((rt, out_dim), lambda i: (i, 0)),
        ),
        compiler_params=pltpu.CompilerParams(
            dimension_semantics=("parallel",)),
    )(x2, w1c, b1, w2c, b2, w3c, b3, w4c, b4)

    return out2.reshape(b, s, out_dim)


def init_params(key, input_dim, units_fc1, units_fc2, units_fc3):
    """Deterministic parameter init (uniform, Kaiming-ish scale like nn.Linear)."""
    def linear(k, fan_in, fan_out):
        kw, kb = jax.random.split(k)
        bound = 1.0 / jnp.sqrt(fan_in)
        w = jax.random.uniform(kw, (fan_in, fan_out), jnp.float32, -bound, bound)
        b = jax.random.uniform(kb, (1, fan_out), jnp.float32, -bound, bound)
        return w, b

    k1, k2, k3, k4 = jax.random.split(key, 4)
    w1, b1 = linear(k1, input_dim, units_fc1)
    w2, b2 = linear(k2, units_fc1, units_fc2)
    w3, b3 = linear(k3, units_fc2, units_fc3)
    w4, b4 = linear(k4, units_fc3, 2)
    return (w1, b1, w2, b2, w3, b3, w4, b4)


def reference_forward(x, params, *, use_bf16=True):
    """Pure-JAX reference with the same operand-casting policy as the kernel."""
    w1, b1, w2, b2, w3, b3, w4, b4 = params
    md = jnp.bfloat16 if use_bf16 else jnp.float32

    def layer(h, w, bias):
        return jnp.dot(h.astype(md), w.astype(md),
                       preferred_element_type=jnp.float32) + bias

    h = jnp.maximum(layer(x, w1, b1), 0.0)
    h = jnp.maximum(layer(h, w2, b2), 0.0)
    h = jnp.maximum(layer(h, w3, b3), 0.0)
    return jax.nn.sigmoid(layer(h, w4, b4))


if __name__ == "__main__":
    # Small shapes implied by the forward: [batch, seq, input_dim].
    batch, seq, input_dim = 2, 8, 32
    units_fc1, units_fc2, units_fc3 = 64, 64, 32

    key = jax.random.PRNGKey(0)
    kx, kp = jax.random.split(key)
    x = jax.random.normal(kx, (batch, seq, input_dim), dtype=jnp.float32)
    params = init_params(kp, input_dim, units_fc1, units_fc2, units_fc3)

    # bf16-MXU path (recommended on v5e / v6e / v7x).
    out = neural_network_forward(x, params)
    out = jax.block_until_ready(out)
    assert out.shape == (batch, seq, 2)

    ref_match = reference_forward(x, params, use_bf16=True)
    assert jnp.allclose(out, ref_match, atol=1e-4, rtol=1e-4), \
        "mismatch vs matched-precision JAX reference"
    ref_f32 = reference_forward(x, params, use_bf16=False)
    assert jnp.allclose(out, ref_f32, atol=5e-2, rtol=5e-2), \
        "bf16 path drifted too far from f32 reference"

    # Pure-f32 MXU path must match the f32 reference tightly.
    out_f32 = jax.block_until_ready(
        neural_network_forward(x, params, use_bf16=False))
    assert jnp.allclose(out_f32, ref_f32, atol=1e-5, rtol=1e-5), \
        "mismatch vs f32 JAX reference"

    # Ragged row count (m = 14 not a multiple of the sublane tile) exercises
    # Pallas partial-block handling (no wrapper-side row padding).
    x_rag = jax.random.normal(jax.random.PRNGKey(1), (2, 7, input_dim),
                              dtype=jnp.float32)
    out_rag = jax.block_until_ready(neural_network_forward(x_rag, params))
    assert out_rag.shape == (2, 7, 2)
    ref_rag = reference_forward(x_rag, params, use_bf16=True)
    assert jnp.allclose(out_rag, ref_rag, atol=1e-4, rtol=1e-4), \
        "ragged-tile mismatch vs matched-precision JAX reference"

    print("KERNEL_OK")
</pallas_src>

<mosaic_0001>
module attributes {stable_mosaic.version = 11 : i64} {
  func.func @_mlp_kernel(%arg0: i32, %arg1: memref<16x32xf32, #tpu.memory_space<vmem>>, %arg2: memref<32x64xbf16, #tpu.memory_space<vmem>>, %arg3: memref<1x64xf32, #tpu.memory_space<vmem>>, %arg4: memref<64x64xbf16, #tpu.memory_space<vmem>>, %arg5: memref<1x64xf32, #tpu.memory_space<vmem>>, %arg6: memref<64x32xbf16, #tpu.memory_space<vmem>>, %arg7: memref<1x32xf32, #tpu.memory_space<vmem>>, %arg8: memref<32x128xbf16, #tpu.memory_space<vmem>>, %arg9: memref<1x2xf32, #tpu.memory_space<vmem>>, %arg10: memref<16x2xf32, #tpu.memory_space<vmem>>) attributes {dimension_semantics = [#tpu.dimension_semantics<parallel>], iteration_bounds = array<i64: 1>, scalar_prefetch = 0 : i64, scratch_operands = 0 : i64, tpu.core_type = #tpu.core_type<tc>, window_params = [{transform_indices = @transform_0, window_bounds = array<i64: 16, 32>}, {pipeline_mode = #tpu.pipeline_mode<synchronous>, transform_indices = @transform_1, window_bounds = array<i64: 32, 64>}, {pipeline_mode = #tpu.pipeline_mode<synchronous>, transform_indices = @transform_2, window_bounds = array<i64: 1, 64>}, {pipeline_mode = #tpu.pipeline_mode<synchronous>, transform_indices = @transform_3, window_bounds = array<i64: 64, 64>}, {pipeline_mode = #tpu.pipeline_mode<synchronous>, transform_indices = @transform_4, window_bounds = array<i64: 1, 64>}, {pipeline_mode = #tpu.pipeline_mode<synchronous>, transform_indices = @transform_5, window_bounds = array<i64: 64, 32>}, {pipeline_mode = #tpu.pipeline_mode<synchronous>, transform_indices = @transform_6, window_bounds = array<i64: 1, 32>}, {pipeline_mode = #tpu.pipeline_mode<synchronous>, transform_indices = @transform_7, window_bounds = array<i64: 32, 128>}, {pipeline_mode = #tpu.pipeline_mode<synchronous>, transform_indices = @transform_8, window_bounds = array<i64: 1, 2>}, {transform_indices = @transform_9, window_bounds = array<i64: 16, 2>}]} {
    %c0 = arith.constant 0 : index
    %c0_0 = arith.constant 0 : index
    %0 = vector.load %arg1[%c0, %c0_0] : memref<16x32xf32, #tpu.memory_space<vmem>>, vector<16x32xf32>
    %1 = arith.truncf %0 : vector<16x32xf32> to vector<16x32xbf16>
    %c0_1 = arith.constant 0 : index
    %c0_2 = arith.constant 0 : index
    %2 = vector.load %arg2[%c0_1, %c0_2] : memref<32x64xbf16, #tpu.memory_space<vmem>>, vector<32x64xbf16>
    %cst = arith.constant dense<0.000000e+00> : vector<16x64xf32>
    %3 = tpu.matmul %1, %2, %cst {dimension_numbers = #tpu.dot_dimension_numbers<[1], [0], [0], [1], [0, 0, 1, 1], [], []>} : vector<16x32xbf16>, vector<32x64xbf16>, vector<16x64xf32> -> vector<16x64xf32>
    %c0_3 = arith.constant 0 : index
    %c0_4 = arith.constant 0 : index
    %4 = vector.load %arg3[%c0_3, %c0_4] : memref<1x64xf32, #tpu.memory_space<vmem>>, vector<1x64xf32>
    %5 = vector.broadcast %4 : vector<1x64xf32> to vector<16x64xf32>
    %6 = arith.addf %3, %5 : vector<16x64xf32>
    %cst_5 = arith.constant 0.000000e+00 : f32
    %7 = vector.broadcast %cst_5 : f32 to vector<16x64xf32>
    %8 = arith.maximumf %6, %7 : vector<16x64xf32>
    %9 = arith.truncf %8 : vector<16x64xf32> to vector<16x64xbf16>
    %c0_6 = arith.constant 0 : index
    %c0_7 = arith.constant 0 : index
    %10 = vector.load %arg4[%c0_6, %c0_7] : memref<64x64xbf16, #tpu.memory_space<vmem>>, vector<64x64xbf16>
    %cst_8 = arith.constant dense<0.000000e+00> : vector<16x64xf32>
    %11 = tpu.matmul %9, %10, %cst_8 {dimension_numbers = #tpu.dot_dimension_numbers<[1], [0], [0], [1], [0, 0, 1, 1], [], []>} : vector<16x64xbf16>, vector<64x64xbf16>, vector<16x64xf32> -> vector<16x64xf32>
    %c0_9 = arith.constant 0 : index
    %c0_10 = arith.constant 0 : index
    %12 = vector.load %arg5[%c0_9, %c0_10] : memref<1x64xf32, #tpu.memory_space<vmem>>, vector<1x64xf32>
    %13 = vector.broadcast %12 : vector<1x64xf32> to vector<16x64xf32>
    %14 = arith.addf %11, %13 : vector<16x64xf32>
    %cst_11 = arith.constant 0.000000e+00 : f32
    %15 = vector.broadcast %cst_11 : f32 to vector<16x64xf32>
    %16 = arith.maximumf %14, %15 : vector<16x64xf32>
    %17 = arith.truncf %16 : vector<16x64xf32> to vector<16x64xbf16>
    %c0_12 = arith.constant 0 : index
    %c0_13 = arith.constant 0 : index
    %18 = vector.load %arg6[%c0_12, %c0_13] : memref<64x32xbf16, #tpu.memory_space<vmem>>, vector<64x32xbf16>
    %cst_14 = arith.constant dense<0.000000e+00> : vector<16x32xf32>
    %19 = tpu.matmul %17, %18, %cst_14 {dimension_numbers = #tpu.dot_dimension_numbers<[1], [0], [0], [1], [0, 0, 1, 1], [], []>} : vector<16x64xbf16>, vector<64x32xbf16>, vector<16x32xf32> -> vector<16x32xf32>
    %c0_15 = arith.constant 0 : index
    %c0_16 = arith.constant 0 : index
    %20 = vector.load %arg7[%c0_15, %c0_16] : memref<1x32xf32, #tpu.memory_space<vmem>>, vector<1x32xf32>
    %21 = vector.broadcast %20 : vector<1x32xf32> to vector<16x32xf32>
    %22 = arith.addf %19, %21 : vector<16x32xf32>
    %cst_17 = arith.constant 0.000000e+00 : f32
    %23 = vector.broadcast %cst_17 : f32 to vector<16x32xf32>
    %24 = arith.maximumf %22, %23 : vector<16x32xf32>
    %25 = arith.truncf %24 : vector<16x32xf32> to vector<16x32xbf16>
    %c0_18 = arith.constant 0 : index
    %c0_19 = arith.constant 0 : index
    %26 = vector.load %arg8[%c0_18, %c0_19] : memref<32x128xbf16, #tpu.memory_space<vmem>>, vector<32x128xbf16>
    %cst_20 = arith.constant dense<0.000000e+00> : vector<16x128xf32>
    %27 = tpu.matmul %25, %26, %cst_20 {dimension_numbers = #tpu.dot_dimension_numbers<[1], [0], [0], [1], [0, 0, 1, 1], [], []>} : vector<16x32xbf16>, vector<32x128xbf16>, vector<16x128xf32> -> vector<16x128xf32>
    %28 = vector.extract_strided_slice %27 {offsets = [0, 0], sizes = [16, 2], strides = [1, 1]} : vector<16x128xf32> to vector<16x2xf32>
    %c0_21 = arith.constant 0 : index
    %c0_22 = arith.constant 0 : index
    %29 = vector.load %arg9[%c0_21, %c0_22] : memref<1x2xf32, #tpu.memory_space<vmem>>, vector<1x2xf32>
    %30 = vector.broadcast %29 : vector<1x2xf32> to vector<16x2xf32>
    %31 = arith.addf %28, %30 : vector<16x2xf32>
    %32 = arith.negf %31 : vector<16x2xf32>
    %33 = math.exp %32 : vector<16x2xf32>
    %cst_23 = arith.constant 1.000000e+00 : f32
    %34 = vector.broadcast %cst_23 : f32 to vector<16x2xf32>
    %35 = arith.addf %34, %33 : vector<16x2xf32>
    %36 = arith.divf %34, %35 : vector<16x2xf32>
    %c0_24 = arith.constant 0 : index
    %c0_25 = arith.constant 0 : index
    %37 = vector.load %arg10[%c0_24, %c0_25] : memref<16x2xf32, #tpu.memory_space<vmem>>, vector<16x2xf32>
    tpu.vector_store %arg10[%c0_24, %c0_25], %36 {strides = array<i32>} : memref<16x2xf32, #tpu.memory_space<vmem>>, vector<16x2xf32>,
    return
  }
  func.func @transform_0(%arg0: i32) -> (i32, i32) {
    %c0_i32 = arith.constant 0 : i32
    %c0_i32_0 = arith.constant 0 : i32
    return %arg0, %c0_i32 : i32, i32
  }
  func.func @transform_1(%arg0: i32) -> (i32, i32) {
    %c0_i32 = arith.constant 0 : i32
    %c0_i32_0 = arith.constant 0 : i32
    %c0_i32_1 = arith.constant 0 : i32
    return %c0_i32, %c0_i32_0 : i32, i32
  }
  func.func @transform_2(%arg0: i32) -> (i32, i32) {
    %c0_i32 = arith.constant 0 : i32
    %c0_i32_0 = arith.constant 0 : i32
    %c0_i32_1 = arith.constant 0 : i32
    return %c0_i32, %c0_i32_0 : i32, i32
  }
  func.func @transform_3(%arg0: i32) -> (i32, i32) {
    %c0_i32 = arith.constant 0 : i32
    %c0_i32_0 = arith.constant 0 : i32
    %c0_i32_1 = arith.constant 0 : i32
    return %c0_i32, %c0_i32_0 : i32, i32
  }
  func.func @transform_4(%arg0: i32) -> (i32, i32) {
    %c0_i32 = arith.constant 0 : i32
    %c0_i32_0 = arith.constant 0 : i32
    %c0_i32_1 = arith.constant 0 : i32
    return %c0_i32, %c0_i32_0 : i32, i32
  }
  func.func @transform_5(%arg0: i32) -> (i32, i32) {
    %c0_i32 = arith.constant 0 : i32
    %c0_i32_0 = arith.constant 0 : i32
    %c0_i32_1 = arith.constant 0 : i32
    return %c0_i32, %c0_i32_0 : i32, i32
  }
  func.func @transform_6(%arg0: i32) -> (i32, i32) {
    %c0_i32 = arith.constant 0 : i32
    %c0_i32_0 = arith.constant 0 : i32
    %c0_i32_1 = arith.constant 0 : i32
    return %c0_i32, %c0_i32_0 : i32, i32
  }
  func.func @transform_7(%arg0: i32) -> (i32, i32) {
    %c0_i32 = arith.constant 0 : i32
    %c0_i32_0 = arith.constant 0 : i32
    %c0_i32_1 = arith.constant 0 : i32
    return %c0_i32, %c0_i32_0 : i32, i32
  }
  func.func @transform_8(%arg0: i32) -> (i32, i32) {
    %c0_i32 = arith.constant 0 : i32
    %c0_i32_0 = arith.constant 0 : i32
    %c0_i32_1 = arith.constant 0 : i32
    return %c0_i32, %c0_i32_0 : i32, i32
  }
  func.func @transform_9(%arg0: i32) -> (i32, i32) {
    %c0_i32 = arith.constant 0 : i32
    %c0_i32_0 = arith.constant 0 : i32
    return %arg0, %c0_i32 : i32, i32
  }
}

</mosaic_0001>

<llo_original>
// kernel: neural_network_forward.1
$region0: #{neural_network_forward.1}
  #allocation0 [shape = 'u32[]', space=smem, size = 0x4, offset = 0x4, fixed_abs, tag = 'smem constant byte address 0x4 - core index']
  #allocation1 [shape = 'u32[144,128]{1,0:T(1,128)}', space=vmem, size = 0x12000, scoped, tag = 'internal scratch']
  %s0 = inlined_call_operand.vmem [shape: f32[16,32], index: 0, kind: input, shape index: {}]
  %s1 = inlined_call_operand.vmem [shape: bf16[32,64], index: 1, kind: input, shape index: {}]
  %s2 = inlined_call_operand.vmem [shape: f32[1,64], index: 2, kind: input, shape index: {}]
  %s3 = inlined_call_operand.vmem [shape: bf16[64,64], index: 3, kind: input, shape index: {}]
  %s4 = inlined_call_operand.vmem [shape: f32[1,64], index: 4, kind: input, shape index: {}]
  %s5 = inlined_call_operand.vmem [shape: bf16[64,32], index: 5, kind: input, shape index: {}]
  %s6 = inlined_call_operand.vmem [shape: f32[1,32], index: 6, kind: input, shape index: {}]
  %s7 = inlined_call_operand.vmem [shape: bf16[32,128], index: 7, kind: input, shape index: {}]
  %s8 = inlined_call_operand.vmem [shape: f32[1,2], index: 8, kind: input, shape index: {}]
  %s9 = inlined_call_operand.vmem [shape: f32[16,2], index: 9, kind: output, shape index: {}]
  %s10 = sld [smem:[#allocation0]]
  $region46: #{neural_network_forward.1} parent=0
    _
  %s12 = ssub.s32 1, %s10
  %s13 = scalar_select 0, %s12, %s10
  // Predicated region
  $region2: #{neural_network_forward.1} parent=0 // pred_check
    _
  $region3: #{neural_network_forward.1} parent=0 // pred_check_branch
    %15 = sbr.rel (0) target = $region5
  $region4: #{neural_network_forward.1} parent=0 // pred_region
    _
  $region5: #{neural_network_forward.1} parent=0 // pred_fallthru
    _
  // Predicated region
  $region6: #{neural_network_forward.1} parent=0 // pred_check
    _
  $region7: #{neural_network_forward.1} parent=0 // pred_check_branch
    %17 = sbr.rel (0) target = $region9
  $region8: #{neural_network_forward.1} parent=0 // pred_region
    _
  $region9: #{neural_network_forward.1} parent=0 // pred_fallthru
    _
  // Predicated region
  $region10: #{neural_network_forward.1} parent=0 // pred_check
    _
  $region11: #{neural_network_forward.1} parent=0 // pred_check_branch
    %19 = sbr.rel (0) target = $region13
  $region12: #{neural_network_forward.1} parent=0 // pred_region
    _
  $region13: #{neural_network_forward.1} parent=0 // pred_fallthru
    _
  // Predicated region
  $region14: #{neural_network_forward.1} parent=0 // pred_check
    _
  $region15: #{neural_network_forward.1} parent=0 // pred_check_branch
    %21 = sbr.rel (0) target = $region17
  $region16: #{neural_network_forward.1} parent=0 // pred_region
    _
  $region17: #{neural_network_forward.1} parent=0 // pred_fallthru
    _
  // Predicated region
  $region18: #{neural_network_forward.1} parent=0 // pred_check
    _
  $region19: #{neural_network_forward.1} parent=0 // pred_check_branch
    %23 = sbr.rel (0) target = $region21
  $region20: #{neural_network_forward.1} parent=0 // pred_region
    _
  $region21: #{neural_network_forward.1} parent=0 // pred_fallthru
    _
  // Predicated region
  $region22: #{neural_network_forward.1} parent=0 // pred_check
    _
  $region23: #{neural_network_forward.1} parent=0 // pred_check_branch
    %25 = sbr.rel (0) target = $region25
  $region24: #{neural_network_forward.1} parent=0 // pred_region
    _
  $region25: #{neural_network_forward.1} parent=0 // pred_fallthru
    _
  // Predicated region
  $region26: #{neural_network_forward.1} parent=0 // pred_check
    _
  $region27: #{neural_network_forward.1} parent=0 // pred_check_branch
    %27 = sbr.rel (0) target = $region29
  $region28: #{neural_network_forward.1} parent=0 // pred_region
    _
  $region29: #{neural_network_forward.1} parent=0 // pred_fallthru
    _
  // Predicated region
  $region30: #{neural_network_forward.1} parent=0 // pred_check
    _
  $region31: #{neural_network_forward.1} parent=0 // pred_check_branch
    %29 = sbr.rel (0) target = $region33
  $region32: #{neural_network_forward.1} parent=0 // pred_region
    _
  $region33: #{neural_network_forward.1} parent=0 // pred_fallthru
    _
  // Predicated region
  $region34: #{neural_network_forward.1} parent=0 // pred_check
    _
  $region35: #{neural_network_forward.1} parent=0 // pred_check_branch
    %31 = sbr.rel (0) target = $region37
  $region36: #{neural_network_forward.1} parent=0 // pred_region
    _
  $region37: #{neural_network_forward.1} parent=0 // pred_fallthru
    _
  %v33 = vld [vmem:[%s0] sm:$0xff]
  %v34 = vld [vmem:[%s0 + $0x8] sm:$0xff]
  %v35 = vpack.c.bf16 %v34, %v33
  %v36 = vld [vmem:[%s1] sm:$0xf]
  %v37 = vld [vmem:[%s1 + $0x4] sm:$0xf]
  %v38 = vld [vmem:[%s1 + $0x8] sm:$0xf]
  %v39 = vld [vmem:[%s1 + $0xc] sm:$0xf]
  %v40 = vld [vmem:[%s2] sm:$0x1]
  %v42 = vlaneseq
  %v43 = vshrl.u32 %v42, 7
  %v44 = vsub.s32 0, %v43
  %v45 = vrot.slane %v40, %v44
  %v51 = vunpack.c.l.b16 %v36
  %v52 = vunpack.c.l.b16 %v37
  %v53 = vunpack.c.l.b16 %v38
  %v54 = vunpack.c.l.b16 %v39
  %v55 = vpack.c.b16 %v52, %v51
  %v56 = vpack.c.b16 %v54, %v53
  %vm59 = vcmask 261120
  %v61 = vsel %vm59, %v35, 0
  %63 = vmatprep.subr.bf16.mxu0 0
  %64 = vmatpush1.bf16.msra.mxu0 0
  %65 = vmatprep.subr.bf16.mxu0 0
  %66 = vmatpush1.bf16.msra.mxu0 0
  %67 = vmatprep.subr.bf16.mxu0 0
  %68 = vmatpush1.bf16.msra.mxu0 0
  %69 = vmatprep.subr.bf16.mxu0 0
  %70 = vmatpush1.bf16.msra.mxu0 0
  %71 = vmatprep.subr.bf16.mxu0 0
  %72 = vmatpush1.bf16.msra.mxu0 0
  %73 = vmatprep.subr.bf16.mxu0 0
  %74 = vmatpush1.bf16.msra.mxu0 0
  %75 = vmatprep.subr.bf16.mxu0 0
  %76 = vmatpush1.bf16.msra.mxu0 %v56
  %77 = vmatprep.subr.bf16.mxu0 0
  %78 = vmatpush1.bf16.msra.mxu0 %v55
  %79 = vmatprep.subr.bf16.mxu0 0
  %80 = vmatpush2.bf16.msra.mxu0 0
  %81 = vmatprep.subr.bf16.mxu0 0
  %82 = vmatpush2.bf16.msra.mxu0 0
  %83 = vmatprep.subr.bf16.mxu0 0
  %84 = vmatpush2.bf16.msra.mxu0 0
  %85 = vmatprep.subr.bf16.mxu0 0
  %86 = vmatpush2.bf16.msra.mxu0 0
  %87 = vmatprep.subr.bf16.mxu0 0
  %88 = vmatpush2.bf16.msra.mxu0 0
  %89 = vmatprep.subr.bf16.mxu0 0
  %90 = vmatpush2.bf16.msra.mxu0 0
  %91 = vmatprep.subr.bf16.mxu0 0
  %92 = vmatpush2.bf16.msra.mxu0 0
  %93 = vmatprep.subr.bf16.mxu0 0
  %94 = vmatpush2.bf16.msra.mxu0 0
  %95 = vmatprep.mubr.bf16.mxu0 0
  %96 = vmatmul.mubr.bf16.gmra.mxu0 %v61
  %v97 = vpop.f32.mrf.mxu0
  %v98 = vadd.f32 %v45, %v97
  %v99 = vpop.f32.mrf.mxu0
  %v100 = vpop.f32.mrf.mxu0
  %v101 = vadd.f32 %v45, %v100
  %v102 = vpop.f32.mrf.mxu0
  %103 = vdwg.mxu0
  %v104 = vmax.f32 %v98, 0.0
  %v105 = vmax.f32 %v101, 0.0
  %v106 = vpack.c.bf16 %v105, %v104
  %v107 = vld [vmem:[%s3] sm:$0xf]
  %v108 = vld [vmem:[%s3 + $0x4] sm:$0xf]
  %v109 = vld [vmem:[%s3 + $0x8] sm:$0xf]
  %v110 = vld [vmem:[%s3 + $0xc] sm:$0xf]
  %v111 = vld [vmem:[%s3 + $0x10] sm:$0xf]
  %v112 = vld [vmem:[%s3 + $0x14] sm:$0xf]
  %v113 = vld [vmem:[%s3 + $0x18] sm:$0xf]
  %v114 = vld [vmem:[%s3 + $0x1c] sm:$0xf]
  %v115 = vld [vmem:[%s4] sm:$0x1]
  %v117 = vlaneseq
  %v118 = vshrl.u32 %v117, 7
  %v119 = vsub.s32 0, %v118
  %v120 = vrot.slane %v115, %v119
  %v130 = vunpack.c.l.b16 %v107
  %v131 = vunpack.c.l.b16 %v108
  %v132 = vunpack.c.l.b16 %v109
  %v133 = vunpack.c.l.b16 %v110
  %v134 = vunpack.c.l.b16 %v111
  %v135 = vunpack.c.l.b16 %v112
  %v136 = vunpack.c.l.b16 %v113
  %v137 = vunpack.c.l.b16 %v114
  %v138 = vpack.c.b16 %v131, %v130
  %v139 = vpack.c.b16 %v133, %v132
  %v140 = vpack.c.b16 %v135, %v134
  %v141 = vpack.c.b16 %v137, %v136
  %vm146 = vcmask 523264
  %v148 = vsel %vm146, %v106, 0
  %150 = vmatprep.subr.bf16.mxu0 0
  %151 = vmatpush1.bf16.msra.mxu0 0
  %152 = vmatprep.subr.bf16.mxu0 0
  %153 = vmatpush1.bf16.msra.mxu0 0
  %154 = vmatprep.subr.bf16.mxu0 0
  %155 = vmatpush1.bf16.msra.mxu0 0
  %156 = vmatprep.subr.bf16.mxu0 0
  %157 = vmatpush1.bf16.msra.mxu0 0
  %158 = vmatprep.subr.bf16.mxu0 0
  %159 = vmatpush1.bf16.msra.mxu0 %v141
  %160 = vmatprep.subr.bf16.mxu0 0
  %161 = vmatpush1.bf16.msra.mxu0 %v140
  %162 = vmatprep.subr.bf16.mxu0 0
  %163 = vmatpush1.bf16.msra.mxu0 %v139
  %164 = vmatprep.subr.bf16.mxu0 0
  %165 = vmatpush1.bf16.msra.mxu0 %v138
  %166 = vmatprep.subr.bf16.mxu0 0
  %167 = vmatpush2.bf16.msra.mxu0 0
  %168 = vmatprep.subr.bf16.mxu0 0
  %169 = vmatpush2.bf16.msra.mxu0 0
  %170 = vmatprep.subr.bf16.mxu0 0
  %171 = vmatpush2.bf16.msra.mxu0 0
  %172 = vmatprep.subr.bf16.mxu0 0
  %173 = vmatpush2.bf16.msra.mxu0 0
  %174 = vmatprep.subr.bf16.mxu0 0
  %175 = vmatpush2.bf16.msra.mxu0 0
  %176 = vmatprep.subr.bf16.mxu0 0
  %177 = vmatpush2.bf16.msra.mxu0 0
  %178 = vmatprep.subr.bf16.mxu0 0
  %179 = vmatpush2.bf16.msra.mxu0 0
  %180 = vmatprep.subr.bf16.mxu0 0
  %181 = vmatpush2.bf16.msra.mxu0 0
  %182 = vmatprep.mubr.bf16.mxu0 0
  %183 = vmatmul.mubr.bf16.gmra.mxu0 %v148
  %v184 = vpop.f32.mrf.mxu0
  %v185 = vadd.f32 %v120, %v184
  %v186 = vpop.f32.mrf.mxu0
  %v187 = vpop.f32.mrf.mxu0
  %v188 = vadd.f32 %v120, %v187
  %v189 = vpop.f32.mrf.mxu0
  %190 = vdwg.mxu0
  %v191 = vmax.f32 %v185, 0.0
  %v192 = vmax.f32 %v188, 0.0
  %v193 = vpack.c.bf16 %v192, %v191
  %v194 = vld [vmem:[%s5] sm:$0xf]
  %v195 = vld [vmem:[%s5 + $0x4] sm:$0xf]
  %v196 = vld [vmem:[%s5 + $0x8] sm:$0xf]
  %v197 = vld [vmem:[%s5 + $0xc] sm:$0xf]
  %v198 = vld [vmem:[%s5 + $0x10] sm:$0xf]
  %v199 = vld [vmem:[%s5 + $0x14] sm:$0xf]
  %v200 = vld [vmem:[%s5 + $0x18] sm:$0xf]
  %v201 = vld [vmem:[%s5 + $0x1c] sm:$0xf]
  %v202 = vld [vmem:[%s6] sm:$0x1]
  %v204 = vlaneseq
  %v205 = vshrl.u32 %v204, 7
  %v206 = vsub.s32 0, %v205
  %v207 = vrot.slane %v202, %v206
  %v217 = vunpack.c.l.b16 %v194
  %v218 = vunpack.c.l.b16 %v195
  %v219 = vunpack.c.l.b16 %v196
  %v220 = vunpack.c.l.b16 %v197
  %v221 = vunpack.c.l.b16 %v198
  %v222 = vunpack.c.l.b16 %v199
  %v223 = vunpack.c.l.b16 %v200
  %v224 = vunpack.c.l.b16 %v201
  %v225 = vpack.c.b16 %v218, %v217
  %v226 = vpack.c.b16 %v220, %v219
  %v227 = vpack.c.b16 %v222, %v221
  %v228 = vpack.c.b16 %v224, %v223
  %v234 = vsel %vm146, %v193, 0
  %236 = vmatprep.subr.bf16.mxu0 0
  %237 = vmatpush1.bf16.msra.mxu0 0
  %238 = vmatprep.subr.bf16.mxu0 0
  %239 = vmatpush1.bf16.msra.mxu0 0
  %240 = vmatprep.subr.bf16.mxu0 0
  %241 = vmatpush1.bf16.msra.mxu0 0
  %242 = vmatprep.subr.bf16.mxu0 0
  %243 = vmatpush1.bf16.msra.mxu0 0
  %244 = vmatprep.subr.bf16.mxu0 0
  %245 = vmatpush1.bf16.msra.mxu0 %v228
  %246 = vmatprep.subr.bf16.mxu0 0
  %247 = vmatpush1.bf16.msra.mxu0 %v227
  %248 = vmatprep.subr.bf16.mxu0 0
  %249 = vmatpush1.bf16.msra.mxu0 %v226
  %250 = vmatprep.subr.bf16.mxu0 0
  %251 = vmatpush1.bf16.msra.mxu0 %v225
  %252 = vmatprep.subr.bf16.mxu0 0
  %253 = vmatpush2.bf16.msra.mxu0 0
  %254 = vmatprep.subr.bf16.mxu0 0
  %255 = vmatpush2.bf16.msra.mxu0 0
  %256 = vmatprep.subr.bf16.mxu0 0
  %257 = vmatpush2.bf16.msra.mxu0 0
  %258 = vmatprep.subr.bf16.mxu0 0
  %259 = vmatpush2.bf16.msra.mxu0 0
  %260 = vmatprep.subr.bf16.mxu0 0
  %261 = vmatpush2.bf16.msra.mxu0 0
  %262 = vmatprep.subr.bf16.mxu0 0
  %263 = vmatpush2.bf16.msra.mxu0 0
  %264 = vmatprep.subr.bf16.mxu0 0
  %265 = vmatpush2.bf16.msra.mxu0 0
  %266 = vmatprep.subr.bf16.mxu0 0
  %267 = vmatpush2.bf16.msra.mxu0 0
  %268 = vmatprep.mubr.bf16.mxu0 0
  %269 = vmatmul.mubr.bf16.gmra.mxu0 %v234
  %v270 = vpop.f32.mrf.mxu0
  %v271 = vadd.f32 %v207, %v270
  %v272 = vpop.f32.mrf.mxu0
  %v273 = vpop.f32.mrf.mxu0
  %v274 = vadd.f32 %v207, %v273
  %v275 = vpop.f32.mrf.mxu0
  %276 = vdwg.mxu0
  %v277 = vmax.f32 %v271, 0.0
  %v278 = vmax.f32 %v274, 0.0
  %v279 = vpack.c.bf16 %v278, %v277
  %v280 = vld [vmem:[%s7] sm:$0xf]
  %v281 = vld [vmem:[%s7 + $0x4] sm:$0xf]
  %v282 = vld [vmem:[%s7 + $0x8] sm:$0xf]
  %v283 = vld [vmem:[%s7 + $0xc] sm:$0xf]
  %v288 = vunpack.c.l.b16 %v280
  %v289 = vunpack.c.l.b16 %v281
  %v290 = vunpack.c.l.b16 %v282
  %v291 = vunpack.c.l.b16 %v283
  %v292 = vpack.c.b16 %v289, %v288
  %v293 = vpack.c.b16 %v291, %v290
  %v297 = vsel %vm59, %v279, 0
  %299 = vmatprep.subr.bf16.mxu0 0
  %300 = vmatpush1.bf16.msra.mxu0 0
  %301 = vmatprep.subr.bf16.mxu0 0
  %302 = vmatpush1.bf16.msra.mxu0 0
  %303 = vmatprep.subr.bf16.mxu0 0
  %304 = vmatpush1.bf16.msra.mxu0 0
  %305 = vmatprep.subr.bf16.mxu0 0
  %306 = vmatpush1.bf16.msra.mxu0 0
  %307 = vmatprep.subr.bf16.mxu0 0
  %308 = vmatpush1.bf16.msra.mxu0 0
  %309 = vmatprep.subr.bf16.mxu0 0
  %310 = vmatpush1.bf16.msra.mxu0 0
  %311 = vmatprep.subr.bf16.mxu0 0
  %312 = vmatpush1.bf16.msra.mxu0 %v293
  %313 = vmatprep.subr.bf16.mxu0 0
  %314 = vmatpush1.bf16.msra.mxu0 %v292
  %315 = vmatprep.subr.bf16.mxu0 0
  %316 = vmatpush2.bf16.msra.mxu0 0
  %317 = vmatprep.subr.bf16.mxu0 0
  %318 = vmatpush2.bf16.msra.mxu0 0
  %319 = vmatprep.subr.bf16.mxu0 0
  %320 = vmatpush2.bf16.msra.mxu0 0
  %321 = vmatprep.subr.bf16.mxu0 0
  %322 = vmatpush2.bf16.msra.mxu0 0
  %323 = vmatprep.subr.bf16.mxu0 0
  %324 = vmatpush2.bf16.msra.mxu0 0
  %325 = vmatprep.subr.bf16.mxu0 0
  %326 = vmatpush2.bf16.msra.mxu0 0
  %327 = vmatprep.subr.bf16.mxu0 0
  %328 = vmatpush2.bf16.msra.mxu0 0
  %329 = vmatprep.subr.bf16.mxu0 0
  %330 = vmatpush2.bf16.msra.mxu0 0
  %331 = vmatprep.mubr.bf16.mxu0 0
  %332 = vmatmul.mubr.bf16.gmra.mxu0 %v297
  %v333 = vpop.f32.mrf.mxu0
  %v334 = vadd.f32 0.0, %v333
  %v335 = vpop.f32.mrf.mxu0
  %v336 = vpop.f32.mrf.mxu0
  %v337 = vadd.f32 0.0, %v336
  %v338 = vpop.f32.mrf.mxu0
  %339 = vdwg.mxu0
  %v340 = vld [vmem:[%s8] sm:$0x1]
  %v342 = vlaneseq
  %v343 = vshrl.u32 %v342, 7
  %v344 = vsub.s32 0, %v343
  %v345 = vrot.slane %v340, %v344
  %v347 = vadd.f32 %v334, %v345
  %v348 = vadd.f32 %v337, %v345
  %v349 = vxor.u32 %v347, 2147483648
  %v350 = vxor.u32 %v348, 2147483648
  %v351 = vmul.f32 %v349, 1.442695
  %v352 = vpow.pop %v351
  %v353 = vmul.f32 %v350, 1.442695
  %v354 = vpow.pop %v353
  %v355 = vadd.f32 %v352, 1.0
  %v356 = vadd.f32 %v354, 1.0
  %v357 = vrcp.pop %v355
  %v358 = vmul.f32 1.0, %v357
  %v359 = vrcp.pop %v356
  %v360 = vmul.f32 1.0, %v359
  %vm361 = vcmask 15360
  %362 = vst.msk [vmem:[%s9] sm:$0xff] %vm361, %v358
  %363 = vst.msk [vmem:[%s9 + $0x8] sm:$0xff] %vm361, %v360
  // Predicated region
  $region38: #{neural_network_forward.1} parent=0 // pred_check
    _
  $region39: #{neural_network_forward.1} parent=0 // pred_check_branch
    %365 = sbr.rel (0) target = $region41
  $region40: #{neural_network_forward.1} parent=0 // pred_region
    _
  $region41: #{neural_network_forward.1} parent=0 // pred_fallthru
    _
  // Predicated region
  $region42: #{neural_network_forward.1} parent=0 // pred_check
    _
  $region43: #{neural_network_forward.1} parent=0 // pred_check_branch
    %367 = sbr.rel (0) target = $region45
  $region44: #{neural_network_forward.1} parent=0 // pred_region
    _
  $region45: #{neural_network_forward.1} parent=0 // pred_fallthru
    _

</llo_original>
